<compile_context>
chip_gen: v6e
topology: v6e:2x2x1
jax: 0.10.0
libtpu: 0.0.40
codegen_flags: <defaults>
</compile_context>

<pallas_src>
import jax
import jax.numpy as jnp
from jax.experimental import pallas as pl
from jax.experimental.pallas import tpu as pltpu

_VAR_EPS = 1e-8   # eps inside sqrt() in LocalVarConv2d
_BN_EPS = 1e-5    # nn.BatchNorm2d default eps


def _conv_var_kernel(pt_ref, wm_ref, ls_ref, noise_ref, y_ref, sum_ref, sq_ref):
    """ReLU -> stochastic conv (as matmul) -> partial BatchNorm statistics."""
    p = jnp.maximum(pt_ref[...], 0.0)                      # ReLU of StdConv (VPU)
    wv = 0.01 + jnp.exp(2.0 * ls_ref[...])                 # variance conv weights (EUP)
    mu = jnp.dot(wm_ref[...], p, preferred_element_type=jnp.float32)        # (C_out, tm)
    var = jnp.dot(wv, p * p, preferred_element_type=jnp.float32)            # (C_out, tm)
    si = jnp.sqrt(_VAR_EPS + var)
    y = mu + si * noise_ref[...]
    y_ref[...] = y
    # Per-channel partial sums for BatchNorm (reduced across tiles in the wrapper).
    sum_ref[0, :, :] = jnp.sum(y, axis=1, keepdims=True)
    sq_ref[0, :, :] = jnp.sum(y * y, axis=1, keepdims=True)


def _bn_kernel(y_ref, scale_ref, shift_ref, o_ref):
    """Training-mode BatchNorm2d: y * scale + shift, broadcast per channel."""
    o_ref[...] = y_ref[...] * scale_ref[...] + shift_ref[...]


def std_conv(x, weight, log_sigma, gamma, beta, noise, *, stride=(1, 1), padding=(1, 1)):
    """StdConv forward.

    x:         (N, C_in, H, W)       float32, NCHW
    weight:    (C_out, C_in, KH, KW) conv weight
    log_sigma: (C_out, C_in, KH, KW) LocalVarConv2d log-sigma parameter
    gamma/beta:(C_out,)              BatchNorm2d affine parameters
    noise:     (N, C_out, Ho, Wo)    standard-normal sample (the torch.normal draw)
    """
    n, c_in, h, w = x.shape
    c_out, _, kh, kw = weight.shape
    sh, sw = stride
    ph, pw = padding
    ho = (h + 2 * ph - kh) // sh + 1
    wo = (w + 2 * pw - kw) // sw + 1
    m = n * ho * wo
    k = c_in * kh * kw

    # ---- im2col (layout plumbing in the wrapper; compute stays in Pallas). ----
    # ReLU commutes with zero-padding / patch extraction, so it is applied in-kernel.
    xp = jnp.pad(x, ((0, 0), (0, 0), (ph, ph), (pw, pw)))
    cols = []
    for i in range(kh):
        for j in range(kw):
            cols.append(xp[:, :, i:i + sh * ho:sh, j:j + sw * wo:sw])
    patches = jnp.stack(cols, axis=2).reshape(n, k, ho, wo)   # K ordering = (c, i, j)
    pt = patches.transpose(1, 0, 2, 3).reshape(k, m)          # (K, M): M on the lane axis
    noise_t = noise.transpose(1, 0, 2, 3).reshape(c_out, m).astype(jnp.float32)

    wm = weight.reshape(c_out, k).astype(jnp.float32)
    ls = log_sigma.reshape(c_out, k).astype(jnp.float32)

    # Pad the contraction dim to a sublane multiple (zero rows contribute nothing).
    k_pad = ((k + 7) // 8) * 8
    if k_pad != k:
        pt = jnp.pad(pt, ((0, k_pad - k), (0, 0)))
        wm = jnp.pad(wm, ((0, 0), (0, k_pad - k)))
        ls = jnp.pad(ls, ((0, 0), (0, k_pad - k)))

    # ---- Tile the lane (M) axis from a VMEM byte budget; multiple of 128. ----
    bytes_per_col = 4 * (k_pad + 3 * c_out)       # patches + noise + y per column
    budget = 4 * 1024 * 1024                      # ~4 MiB live per grid step (v7x-safe)
    tm = max(128, min(2048, (budget // bytes_per_col) // 128 * 128))
    tm = min(tm, pl.cdiv(m, 128) * 128)           # tiny inputs -> single small block
    m_pad = pl.cdiv(m, tm) * tm
    n_tiles = m_pad // tm

    pt = jnp.pad(pt, ((0, 0), (0, m_pad - m)))
    noise_t = jnp.pad(noise_t, ((0, 0), (0, m_pad - m)))   # zero noise => padded y == 0

    y_t, psum, psq = pl.pallas_call(
        _conv_var_kernel,
        out_shape=(
            jax.ShapeDtypeStruct((c_out, m_pad), jnp.float32),
            jax.ShapeDtypeStruct((n_tiles, c_out, 1), jnp.float32),
            jax.ShapeDtypeStruct((n_tiles, c_out, 1), jnp.float32),
        ),
        grid_spec=pltpu.PrefetchScalarGridSpec(
            num_scalar_prefetch=0,
            grid=(n_tiles,),
            in_specs=[
                pl.BlockSpec((k_pad, tm), lambda i: (0, i)),
                pl.BlockSpec((c_out, k_pad), lambda i: (0, 0)),
                pl.BlockSpec((c_out, k_pad), lambda i: (0, 0)),
                pl.BlockSpec((c_out, tm), lambda i: (0, i)),
            ],
            out_specs=[
                pl.BlockSpec((c_out, tm), lambda i: (0, i)),
                pl.BlockSpec((1, c_out, 1), lambda i: (i, 0, 0)),
                pl.BlockSpec((1, c_out, 1), lambda i: (i, 0, 0)),
            ],
        ),
        compiler_params=pltpu.CompilerParams(dimension_semantics=("parallel",)),
    )(pt, wm, ls, noise_t)

    # ---- Finalize BatchNorm statistics (tiny per-channel math). ----
    total = jnp.sum(psum, axis=0)[:, 0]
    total_sq = jnp.sum(psq, axis=0)[:, 0]
    mean = total / m
    var = total_sq / m - mean * mean               # biased variance (training-mode BN)
    inv = gamma / jnp.sqrt(var + _BN_EPS)
    scale = inv.reshape(c_out, 1).astype(jnp.float32)
    shift = (beta - mean * inv).reshape(c_out, 1).astype(jnp.float32)
    # TODO(synk): BatchNorm running_mean/running_var momentum updates are a training-only
    # side effect with no returned value; they are not materialized here.

    out_t = pl.pallas_call(
        _bn_kernel,
        out_shape=jax.ShapeDtypeStruct((c_out, m_pad), jnp.float32),
        grid_spec=pltpu.PrefetchScalarGridSpec(
            num_scalar_prefetch=0,
            grid=(n_tiles,),
            in_specs=[
                pl.BlockSpec((c_out, tm), lambda i: (0, i)),
                pl.BlockSpec((c_out, 1), lambda i: (0, 0)),
                pl.BlockSpec((c_out, 1), lambda i: (0, 0)),
            ],
            out_specs=pl.BlockSpec((c_out, tm), lambda i: (0, i)),
        ),
        compiler_params=pltpu.CompilerParams(dimension_semantics=("parallel",)),
    )(y_t, scale, shift)

    out = out_t[:, :m].reshape(c_out, n, ho, wo).transpose(1, 0, 2, 3)
    return out


def std_conv_ref(x, weight, log_sigma, gamma, beta, noise, *, stride=(1, 1), padding=(1, 1)):
    """Pure-JAX reference of the same forward pass (for correctness checking)."""
    xr = jnp.maximum(x, 0.0)
    dn = ("NCHW", "OIHW", "NCHW")
    pad = [(padding[0], padding[0]), (padding[1], padding[1])]
    mu = jax.lax.conv_general_dilated(xr, weight, stride, pad, dimension_numbers=dn,
                                      precision=jax.lax.Precision.HIGHEST)
    wv = 0.01 + jnp.exp(2.0 * log_sigma)
    var = jax.lax.conv_general_dilated(xr * xr, wv, stride, pad, dimension_numbers=dn,
                                       precision=jax.lax.Precision.HIGHEST)
    y = mu + jnp.sqrt(_VAR_EPS + var) * noise
    m = jnp.mean(y, axis=(0, 2, 3), keepdims=True)
    v = jnp.var(y, axis=(0, 2, 3), keepdims=True)
    g = gamma.reshape(1, -1, 1, 1)
    b = beta.reshape(1, -1, 1, 1)
    return (y - m) / jnp.sqrt(v + _BN_EPS) * g + b


if __name__ == "__main__":
    key = jax.random.PRNGKey(0)
    k_x, k_w, k_n = jax.random.split(key, 3)

    n, c_in, h, w = 2, 4, 16, 16
    c_out, kh, kw = 8, 3, 3
    stride, padding = (1, 1), (1, 1)
    ho = (h + 2 * padding[0] - kh) // stride[0] + 1
    wo = (w + 2 * padding[1] - kw) // stride[1] + 1

    x = jax.random.normal(k_x, (n, c_in, h, w), dtype=jnp.float32)
    weight = 0.1 * jax.random.normal(k_w, (c_out, c_in, kh, kw), dtype=jnp.float32)
    log_sigma = jnp.full((c_out, c_in, kh, kw), -3.0, dtype=jnp.float32)
    gamma = jnp.ones((c_out,), dtype=jnp.float32)
    beta = jnp.zeros((c_out,), dtype=jnp.float32)
    noise = jax.random.normal(k_n, (n, c_out, ho, wo), dtype=jnp.float32)

    out = std_conv(x, weight, log_sigma, gamma, beta, noise, stride=stride, padding=padding)
    jax.block_until_ready(out)

    assert out.shape == (n, c_out, ho, wo)
    assert out.dtype == jnp.float32

    ref = std_conv_ref(x, weight, log_sigma, gamma, beta, noise, stride=stride, padding=padding)
    err = float(jnp.max(jnp.abs(out - ref)))
    assert err < 1e-2, f"max abs err {err}"

    print("KERNEL_OK")
</pallas_src>

<mosaic_0001>
module attributes {stable_mosaic.version = 11 : i64} {
  func.func @_conv_var_kernel(%arg0: i32, %arg1: memref<40x512xf32, #tpu.memory_space<vmem>>, %arg2: memref<8x40xf32, #tpu.memory_space<vmem>>, %arg3: memref<8x40xf32, #tpu.memory_space<vmem>>, %arg4: memref<8x512xf32, #tpu.memory_space<vmem>>, %arg5: memref<8x512xf32, #tpu.memory_space<vmem>>, %arg6: memref<1x8x1xf32, #tpu.memory_space<vmem>>, %arg7: memref<1x8x1xf32, #tpu.memory_space<vmem>>) attributes {dimension_semantics = [#tpu.dimension_semantics<parallel>], iteration_bounds = array<i64: 1>, scalar_prefetch = 0 : i64, scratch_operands = 0 : i64, tpu.core_type = #tpu.core_type<tc>, window_params = [{transform_indices = @transform_0, window_bounds = array<i64: 40, 512>}, {pipeline_mode = #tpu.pipeline_mode<synchronous>, transform_indices = @transform_1, window_bounds = array<i64: 8, 40>}, {pipeline_mode = #tpu.pipeline_mode<synchronous>, transform_indices = @transform_2, window_bounds = array<i64: 8, 40>}, {transform_indices = @transform_3, window_bounds = array<i64: 8, 512>}, {transform_indices = @transform_4, window_bounds = array<i64: 8, 512>}, {transform_indices = @transform_5, window_bounds = array<i64: 1, 8, 1>}, {transform_indices = @transform_6, window_bounds = array<i64: 1, 8, 1>}]} {
    %c0 = arith.constant 0 : index
    %c0_0 = arith.constant 0 : index
    %0 = vector.load %arg1[%c0, %c0_0] : memref<40x512xf32, #tpu.memory_space<vmem>>, vector<40x512xf32>
    %cst = arith.constant 0.000000e+00 : f32
    %1 = vector.broadcast %cst : f32 to vector<40x512xf32>
    %2 = arith.maximumf %0, %1 : vector<40x512xf32>
    %c0_1 = arith.constant 0 : index
    %c0_2 = arith.constant 0 : index
    %3 = vector.load %arg3[%c0_1, %c0_2] : memref<8x40xf32, #tpu.memory_space<vmem>>, vector<8x40xf32>
    %cst_3 = arith.constant 2.000000e+00 : f32
    %4 = vector.broadcast %cst_3 : f32 to vector<8x40xf32>
    %5 = arith.mulf %4, %3 : vector<8x40xf32>
    %6 = math.exp %5 : vector<8x40xf32>
    %cst_4 = arith.constant 0.00999999977 : f32
    %7 = vector.broadcast %cst_4 : f32 to vector<8x40xf32>
    %8 = arith.addf %7, %6 : vector<8x40xf32>
    %c0_5 = arith.constant 0 : index
    %c0_6 = arith.constant 0 : index
    %9 = vector.load %arg2[%c0_5, %c0_6] : memref<8x40xf32, #tpu.memory_space<vmem>>, vector<8x40xf32>
    %cst_7 = arith.constant dense<0.000000e+00> : vector<8x512xf32>
    %10 = tpu.matmul %9, %2, %cst_7 {dimension_numbers = #tpu.dot_dimension_numbers<[1], [0], [0], [1], [0, 0, 1, 1], [], []>} : vector<8x40xf32>, vector<40x512xf32>, vector<8x512xf32> -> vector<8x512xf32>
    %11 = arith.mulf %2, %2 : vector<40x512xf32>
    %cst_8 = arith.constant dense<0.000000e+00> : vector<8x512xf32>
    %12 = tpu.matmul %8, %11, %cst_8 {dimension_numbers = #tpu.dot_dimension_numbers<[1], [0], [0], [1], [0, 0, 1, 1], [], []>} : vector<8x40xf32>, vector<40x512xf32>, vector<8x512xf32> -> vector<8x512xf32>
    %cst_9 = arith.constant 9.99999993E-9 : f32
    %13 = vector.broadcast %cst_9 : f32 to vector<8x512xf32>
    %14 = arith.addf %13, %12 : vector<8x512xf32>
    %15 = math.sqrt %14 : vector<8x512xf32>
    %c0_10 = arith.constant 0 : index
    %c0_11 = arith.constant 0 : index
    %16 = vector.load %arg4[%c0_10, %c0_11] : memref<8x512xf32, #tpu.memory_space<vmem>>, vector<8x512xf32>
    %17 = arith.mulf %15, %16 : vector<8x512xf32>
    %18 = arith.addf %10, %17 : vector<8x512xf32>
    %c0_12 = arith.constant 0 : index
    %c0_13 = arith.constant 0 : index
    %19 = vector.load %arg5[%c0_12, %c0_13] : memref<8x512xf32, #tpu.memory_space<vmem>>, vector<8x512xf32>
    tpu.vector_store %arg5[%c0_12, %c0_13], %18 {strides = array<i32>} : memref<8x512xf32, #tpu.memory_space<vmem>>, vector<8x512xf32>,
    %cst_14 = arith.constant dense<0.000000e+00> : vector<8xf32>
    %20 = vector.multi_reduction <add>, %18, %cst_14 [1] : vector<8x512xf32> to vector<8xf32>
    %21 = vector.shape_cast %20 : vector<8xf32> to vector<8x1xf32>
    %c0_15 = arith.constant 0 : index
    %c0_16 = arith.constant 0 : index
    %c0_17 = arith.constant 0 : index
    %22 = vector.load %arg6[%c0_15, %c0_16, %c0_17] : memref<1x8x1xf32, #tpu.memory_space<vmem>>, vector<1x8x1xf32>
    %23 = vector.shape_cast %22 : vector<1x8x1xf32> to vector<8x1xf32>
    %24 = vector.shape_cast %21 : vector<8x1xf32> to vector<1x8x1xf32>
    tpu.vector_store %arg6[%c0_15, %c0_16, %c0_17], %24 {strides = array<i32>} : memref<1x8x1xf32, #tpu.memory_space<vmem>>, vector<1x8x1xf32>,
    %25 = arith.mulf %18, %18 : vector<8x512xf32>
    %cst_18 = arith.constant dense<0.000000e+00> : vector<8xf32>
    %26 = vector.multi_reduction <add>, %25, %cst_18 [1] : vector<8x512xf32> to vector<8xf32>
    %27 = vector.shape_cast %26 : vector<8xf32> to vector<8x1xf32>
    %c0_19 = arith.constant 0 : index
    %c0_20 = arith.constant 0 : index
    %c0_21 = arith.constant 0 : index
    %28 = vector.load %arg7[%c0_19, %c0_20, %c0_21] : memref<1x8x1xf32, #tpu.memory_space<vmem>>, vector<1x8x1xf32>
    %29 = vector.shape_cast %28 : vector<1x8x1xf32> to vector<8x1xf32>
    %30 = vector.shape_cast %27 : vector<8x1xf32> to vector<1x8x1xf32>
    tpu.vector_store %arg7[%c0_19, %c0_20, %c0_21], %30 {strides = array<i32>} : memref<1x8x1xf32, #tpu.memory_space<vmem>>, vector<1x8x1xf32>,
    return
  }
  func.func @transform_0(%arg0: i32) -> (i32, i32) {
    %c0_i32 = arith.constant 0 : i32
    %c0_i32_0 = arith.constant 0 : i32
    return %c0_i32, %arg0 : i32, i32
  }
  func.func @transform_1(%arg0: i32) -> (i32, i32) {
    %c0_i32 = arith.constant 0 : i32
    %c0_i32_0 = arith.constant 0 : i32
    %c0_i32_1 = arith.constant 0 : i32
    return %c0_i32, %c0_i32_0 : i32, i32
  }
  func.func @transform_2(%arg0: i32) -> (i32, i32) {
    %c0_i32 = arith.constant 0 : i32
    %c0_i32_0 = arith.constant 0 : i32
    %c0_i32_1 = arith.constant 0 : i32
    return %c0_i32, %c0_i32_0 : i32, i32
  }
  func.func @transform_3(%arg0: i32) -> (i32, i32) {
    %c0_i32 = arith.constant 0 : i32
    %c0_i32_0 = arith.constant 0 : i32
    return %c0_i32, %arg0 : i32, i32
  }
  func.func @transform_4(%arg0: i32) -> (i32, i32) {
    %c0_i32 = arith.constant 0 : i32
    %c0_i32_0 = arith.constant 0 : i32
    return %c0_i32, %arg0 : i32, i32
  }
  func.func @transform_5(%arg0: i32) -> (i32, i32, i32) {
    %c0_i32 = arith.constant 0 : i32
    %c0_i32_0 = arith.constant 0 : i32
    %c0_i32_1 = arith.constant 0 : i32
    return %arg0, %c0_i32, %c0_i32_0 : i32, i32, i32
  }
  func.func @transform_6(%arg0: i32) -> (i32, i32, i32) {
    %c0_i32 = arith.constant 0 : i32
    %c0_i32_0 = arith.constant 0 : i32
    %c0_i32_1 = arith.constant 0 : i32
    return %arg0, %c0_i32, %c0_i32_0 : i32, i32, i32
  }
}

</mosaic_0001>

<llo_original>
// kernel: tpu_custom_call.1
$region0: #{tpu_custom_call.1}
  #allocation0 [shape = 'u32[]', space=smem, size = 0x4, offset = 0x4, fixed_abs, tag = 'smem constant byte address 0x4 - core index']
  #allocation1 [shape = 'u32[144,128]{1,0:T(1,128)}', space=vmem, size = 0x12000, scoped, tag = 'internal scratch']
  %s0 = inlined_call_operand.hbm [shape: f32[40,512], index: 0, kind: input, shape index: {}]
  %s1 = inlined_call_operand.hbm [shape: f32[8,40], index: 1, kind: input, shape index: {}]
  %s2 = inlined_call_operand.hbm [shape: f32[8,40], index: 2, kind: input, shape index: {}]
  %s3 = inlined_call_operand.hbm [shape: f32[8,512], index: 3, kind: input, shape index: {}]
  %s4 = inlined_call_operand.hbm [shape: f32[8,512], index: 4, kind: output, shape index: {0}]
  %s5 = inlined_call_operand.vmem [shape: f32[1,8,1], index: 5, kind: output, shape index: {1}]
  %s6 = inlined_call_operand.vmem [shape: f32[1,8,1], index: 6, kind: output, shape index: {2}]
  %7 = xla_tuple %s4, %s5, %s6
  %s8 = sld [smem:[#allocation0]]
  $region58: #{tpu_custom_call.1} parent=0
    _
  %s10 = ssub.s32 1, %s8
  %s11 = scalar_select 0, %s10, %s8
  $region1: #{tpu_custom_call.1} parent=0
    #allocation2 [shape = 'u8[81920]{0}', space=vmem, size = 0x14000, scoped, tag = 'input window, operand 0, single buffered']
    #allocation3 [shape = 's32[1]{0}', space=sflag, size = 0x4, scoped, tag = 'scoped memory for tpu_custom_call.1']
    #allocation4 [shape = 's32[1]{0}', space=sflag, size = 0x4, scoped, tag = 'scoped memory for tpu_custom_call.1']
    #allocation5 [shape = 'u8[4096]{0}', space=vmem, size = 0x1000, scoped, tag = 'input window, operand 1, single buffered']
    #allocation6 [shape = 's32[1]{0}', space=sflag, size = 0x4, scoped, tag = 'scoped memory for tpu_custom_call.1']
    #allocation7 [shape = 'u8[4096]{0}', space=vmem, size = 0x1000, scoped, tag = 'input window, operand 2, single buffered']
    #allocation8 [shape = 'u8[16384]{0}', space=vmem, size = 0x4000, scoped, tag = 'input window, operand 3, single buffered']
    #allocation9 [shape = 's32[1]{0}', space=sflag, size = 0x4, scoped, tag = 'scoped memory for tpu_custom_call.1']
    #allocation10 [shape = 'u8[16384]{0}', space=vmem, size = 0x4000, scoped, tag = 'output window, operand 0, single buffered']
    %12 = vsyncpa [#allocation3], 0
    %13 = vsyncpa [#allocation6], 0
    %14 = vsyncpa [#allocation9], 0
    %15 = vsyncpa [#allocation4], 0
    // Predicated region
    $region2: #{tpu_custom_call.1} parent=1 // pred_check
      _
    $region3: #{tpu_custom_call.1} parent=1 // pred_check_branch
      %17 = sbr.rel (0) target = $region5
    $region4: #{tpu_custom_call.1} parent=1 // pred_region
      %s19 = ssub.s32 2560, 2560
      %20 = vsyncadd [#allocation3], %s19
      %s21 = sshll.u32 [#allocation2], 4
      %s22 = int_to_ptr.vmem [resolvable:$true] %s21
      %27 = dma.hbm_to_vmem [thread:$0]  %s0, 2560, %s22, [#allocation3], 512, 512, 32
    $region5: #{tpu_custom_call.1} parent=1 // pred_fallthru
      _
    // Predicated region
    $region6: #{tpu_custom_call.1} parent=1 // pred_check
      _
    $region7: #{tpu_custom_call.1} parent=1 // pred_check_branch
      %29 = sbr.rel (0) target = $region9
    $region8: #{tpu_custom_call.1} parent=1 // pred_region
      %s31 = ssub.s32 128, 128
      %32 = vsyncadd [#allocation6], %s31
      %s34 = sshll.u32 [#allocation5], 4
      %s35 = int_to_ptr.vmem [resolvable:$true] %s34
      %37 = dma.hbm_to_vmem [thread:$0]  %s1, 128, %s35, [#allocation6]
    $region9: #{tpu_custom_call.1} parent=1 // pred_fallthru
      _
    // Predicated region
    $region10: #{tpu_custom_call.1} parent=1 // pred_check
      _
    $region11: #{tpu_custom_call.1} parent=1 // pred_check_branch
      %39 = sbr.rel (0) target = $region13
    $region12: #{tpu_custom_call.1} parent=1 // pred_region
      %s41 = ssub.s32 128, 128
      %42 = vsyncadd [#allocation6], %s41
      %s44 = sshll.u32 [#allocation7], 4
      %s45 = int_to_ptr.vmem [resolvable:$true] %s44
      %47 = dma.hbm_to_vmem [thread:$0]  %s2, 128, %s45, [#allocation6]
    $region13: #{tpu_custom_call.1} parent=1 // pred_fallthru
      _
    // Predicated region
    $region14: #{tpu_custom_call.1} parent=1 // pred_check
      _
    $region15: #{tpu_custom_call.1} parent=1 // pred_check_branch
      %49 = sbr.rel (0) target = $region17
    $region16: #{tpu_custom_call.1} parent=1 // pred_region
      %s51 = ssub.s32 512, 512
      %52 = vsyncadd [#allocation9], %s51
      %s54 = sshll.u32 [#allocation8], 4
      %s55 = int_to_ptr.vmem [resolvable:$true] %s54
      %57 = dma.hbm_to_vmem [thread:$0]  %s3, 512, %s55, [#allocation9]
    $region17: #{tpu_custom_call.1} parent=1 // pred_fallthru
      _
    // Predicated region
    $region18: #{tpu_custom_call.1} parent=1 // pred_check
      _
    $region19: #{tpu_custom_call.1} parent=1 // pred_check_branch
      %59 = sbr.rel (0) target = $region21
    $region20: #{tpu_custom_call.1} parent=1 // pred_region
      %60 = dma.done [#allocation3], 2560
    $region21: #{tpu_custom_call.1} parent=1 // pred_fallthru
      _
    // Predicated region
    $region22: #{tpu_custom_call.1} parent=1 // pred_check
      _
    $region23: #{tpu_custom_call.1} parent=1 // pred_check_branch
      %62 = sbr.rel (0) target = $region25
    $region24: #{tpu_custom_call.1} parent=1 // pred_region
      %63 = dma.done [#allocation6], 128
    $region25: #{tpu_custom_call.1} parent=1 // pred_fallthru
      _
    // Predicated region
    $region26: #{tpu_custom_call.1} parent=1 // pred_check
      _
    $region27: #{tpu_custom_call.1} parent=1 // pred_check_branch
      %65 = sbr.rel (0) target = $region29
    $region28: #{tpu_custom_call.1} parent=1 // pred_region
      %66 = dma.done [#allocation6], 128
    $region29: #{tpu_custom_call.1} parent=1 // pred_fallthru
      _
    // Predicated region
    $region30: #{tpu_custom_call.1} parent=1 // pred_check
      _
    $region31: #{tpu_custom_call.1} parent=1 // pred_check_branch
      %68 = sbr.rel (0) target = $region33
    $region32: #{tpu_custom_call.1} parent=1 // pred_region
      %69 = dma.done [#allocation9], 512
    $region33: #{tpu_custom_call.1} parent=1 // pred_fallthru
      _
    %v70 = vld [vmem:[#allocation2] sm:$0xff]
    %v71 = vld [vmem:[#allocation2 + $0x8] sm:$0xff]
    %v72 = vld [vmem:[#allocation2 + $0x10] sm:$0xff]
    %v73 = vld [vmem:[#allocation2 + $0x18] sm:$0xff]
    %v74 = vld [vmem:[#allocation2 + $0x20] sm:$0xff]
    %v75 = vld [vmem:[#allocation2 + $0x28] sm:$0xff]
    %v76 = vld [vmem:[#allocation2 + $0x30] sm:$0xff]
    %v77 = vld [vmem:[#allocation2 + $0x38] sm:$0xff]
    %v78 = vld [vmem:[#allocation2 + $0x40] sm:$0xff]
    %v79 = vld [vmem:[#allocation2 + $0x48] sm:$0xff]
    %v80 = vld [vmem:[#allocation2 + $0x50] sm:$0xff]
    %v81 = vld [vmem:[#allocation2 + $0x58] sm:$0xff]
    %v82 = vld [vmem:[#allocation2 + $0x60] sm:$0xff]
    %v83 = vld [vmem:[#allocation2 + $0x68] sm:$0xff]
    %v84 = vld [vmem:[#allocation2 + $0x70] sm:$0xff]
    %v85 = vld [vmem:[#allocation2 + $0x78] sm:$0xff]
    %v86 = vld [vmem:[#allocation2 + $0x80] sm:$0xff]
    %v87 = vld [vmem:[#allocation2 + $0x88] sm:$0xff]
    %v88 = vld [vmem:[#allocation2 + $0x90] sm:$0xff]
    %v89 = vld [vmem:[#allocation2 + $0x98] sm:$0xff]
    %v90 = vmax.f32 %v70, 0.0
    %v91 = vmax.f32 %v71, 0.0
    %v92 = vmax.f32 %v72, 0.0
    %v93 = vmax.f32 %v73, 0.0
    %v94 = vmax.f32 %v74, 0.0
    %v95 = vmax.f32 %v75, 0.0
    %v96 = vmax.f32 %v76, 0.0
    %v97 = vmax.f32 %v77, 0.0
    %v98 = vmax.f32 %v78, 0.0
    %v99 = vmax.f32 %v79, 0.0
    %v100 = vmax.f32 %v80, 0.0
    %v101 = vmax.f32 %v81, 0.0
    %v102 = vmax.f32 %v82, 0.0
    %v103 = vmax.f32 %v83, 0.0
    %v104 = vmax.f32 %v84, 0.0
    %v105 = vmax.f32 %v85, 0.0
    %v106 = vmax.f32 %v86, 0.0
    %v107 = vmax.f32 %v87, 0.0
    %v108 = vmax.f32 %v88, 0.0
    %v109 = vmax.f32 %v89, 0.0
    %v110 = vld [vmem:[#allocation7] sm:$0xff]
    %v111 = vmul.f32 %v110, 2.0
    %v112 = vmul.f32 %v111, 1.442695
    %v113 = vpow.pop %v112
    %v114 = vadd.f32 %v113, 0.01
    %v115 = vld [vmem:[#allocation5] sm:$0xff]
    %v116 = vmul.f32 %v90, %v90
    %v117 = vmul.f32 %v91, %v91
    %v118 = vmul.f32 %v92, %v92
    %v119 = vmul.f32 %v93, %v93
    %v120 = vmul.f32 %v94, %v94
    %v121 = vmul.f32 %v95, %v95
    %v122 = vmul.f32 %v96, %v96
    %v123 = vmul.f32 %v97, %v97
    %v124 = vmul.f32 %v98, %v98
    %v125 = vmul.f32 %v99, %v99
    %v126 = vmul.f32 %v100, %v100
    %v127 = vmul.f32 %v101, %v101
    %v128 = vmul.f32 %v102, %v102
    %v129 = vmul.f32 %v103, %v103
    %v130 = vmul.f32 %v104, %v104
    %v131 = vmul.f32 %v105, %v105
    %v132 = vmul.f32 %v106, %v106
    %v133 = vmul.f32 %v107, %v107
    %v134 = vmul.f32 %v108, %v108
    %v135 = vmul.f32 %v109, %v109
    %vm136 = vcmask 326656
    %v138 = vsel %vm136, %v114, 0
    %140 = vmatprep.subr.mxu0 0.0
    %141 = vmatpush1.msra.mxu0 0.0
    %142 = vmatprep.subr.mxu0 0.0
    %143 = vmatpush1.msra.mxu0 0.0
    %144 = vmatprep.subr.mxu0 0.0
    %145 = vmatpush1.msra.mxu0 0.0
    %146 = vmatprep.subr.mxu0 0.0
    %147 = vmatpush1.msra.mxu0 0.0
    %148 = vmatprep.subr.mxu0 0.0
    %149 = vmatpush1.msra.mxu0 0.0
    %150 = vmatprep.subr.mxu0 0.0
    %151 = vmatpush1.msra.mxu0 0.0
    %152 = vmatprep.subr.mxu0 0.0
    %153 = vmatpush1.msra.mxu0 0.0
    %154 = vmatprep.subr.mxu0 0.0
    %155 = vmatpush1.msra.mxu0 0.0
    %156 = vmatprep.subr.mxu0 0.0
    %157 = vmatpush1.msra.mxu0 0.0
    %158 = vmatprep.subr.mxu0 0.0
    %159 = vmatpush1.msra.mxu0 0.0
    %160 = vmatprep.subr.mxu0 0.0
    %161 = vmatpush1.msra.mxu0 0.0
    %162 = vmatprep.subr.mxu0 %v133
    %163 = vmatpush1.msra.mxu0 %v132
    %164 = vmatprep.subr.mxu0 %v129
    %165 = vmatpush1.msra.mxu0 %v128
    %166 = vmatprep.subr.mxu0 %v125
    %167 = vmatpush1.msra.mxu0 %v124
    %168 = vmatprep.subr.mxu0 %v121
    %169 = vmatpush1.msra.mxu0 %v120
    %170 = vmatprep.subr.mxu0 %v117
    %171 = vmatpush1.msra.mxu0 %v116
    %172 = vmatprep.subr.mxu0 0.0
    %173 = vmatpush2.msra.mxu0 0.0
    %174 = vmatprep.subr.mxu0 0.0
    %175 = vmatpush2.msra.mxu0 0.0
    %176 = vmatprep.subr.mxu0 0.0
    %177 = vmatpush2.msra.mxu0 0.0
    %178 = vmatprep.subr.mxu0 0.0
    %179 = vmatpush2.msra.mxu0 0.0
    %180 = vmatprep.subr.mxu0 0.0
    %181 = vmatpush2.msra.mxu0 0.0
    %182 = vmatprep.subr.mxu0 0.0
    %183 = vmatpush2.msra.mxu0 0.0
    %184 = vmatprep.subr.mxu0 0.0
    %185 = vmatpush2.msra.mxu0 0.0
    %186 = vmatprep.subr.mxu0 0.0
    %187 = vmatpush2.msra.mxu0 0.0
    %188 = vmatprep.subr.mxu0 0.0
    %189 = vmatpush2.msra.mxu0 0.0
    %190 = vmatprep.subr.mxu0 0.0
    %191 = vmatpush2.msra.mxu0 0.0
    %192 = vmatprep.subr.mxu0 0.0
    %193 = vmatpush2.msra.mxu0 0.0
    %194 = vmatprep.subr.mxu0 0.0
    %195 = vmatpush2.msra.mxu0 0.0
    %196 = vmatprep.subr.mxu0 0.0
    %197 = vmatpush2.msra.mxu0 0.0
    %198 = vmatprep.subr.mxu0 0.0
    %199 = vmatpush2.msra.mxu0 0.0
    %200 = vmatprep.subr.mxu0 0.0
    %201 = vmatpush2.msra.mxu0 0.0
    %202 = vmatprep.subr.mxu0 0.0
    %203 = vmatpush2.msra.mxu0 0.0
    %204 = vmatprep.mubr.f32.mxu0 0.0
    %205 = vmatmul.mubr.f32.gmra.mxu0 %v138
    %v206 = vpop.f32.mrf.mxu0
    %v207 = vadd.f32 1e-08, %v206
    %v208 = vpop.f32.mrf.mxu0
    %v209 = vadd.f32 1e-08, %v208
    %210 = vdwg.mxu0
    %211 = vmatprep.subr.mxu0 0.0
    %212 = vmatpush1.msra.mxu0 0.0
    %213 = vmatprep.subr.mxu0 0.0
    %214 = vmatpush1.msra.mxu0 0.0
    %215 = vmatprep.subr.mxu0 0.0
    %216 = vmatpush1.msra.mxu0 0.0
    %217 = vmatprep.subr.mxu0 0.0
    %218 = vmatpush1.msra.mxu0 0.0
    %219 = vmatprep.subr.mxu0 0.0
    %220 = vmatpush1.msra.mxu0 0.0
    %221 = vmatprep.subr.mxu0 0.0
    %222 = vmatpush1.msra.mxu0 0.0
    %223 = vmatprep.subr.mxu0 0.0
    %224 = vmatpush1.msra.mxu0 0.0
    %225 = vmatprep.subr.mxu0 0.0
    %226 = vmatpush1.msra.mxu0 0.0
    %227 = vmatprep.subr.mxu0 0.0
    %228 = vmatpush1.msra.mxu0 0.0
    %229 = vmatprep.subr.mxu0 0.0
    %230 = vmatpush1.msra.mxu0 0.0
    %231 = vmatprep.subr.mxu0 0.0
    %232 = vmatpush1.msra.mxu0 0.0
    %233 = vmatprep.subr.mxu0 %v135
    %234 = vmatpush1.msra.mxu0 %v134
    %235 = vmatprep.subr.mxu0 %v131
    %236 = vmatpush1.msra.mxu0 %v130
    %237 = vmatprep.subr.mxu0 %v127
    %238 = vmatpush1.msra.mxu0 %v126
    %239 = vmatprep.subr.mxu0 %v123
    %240 = vmatpush1.msra.mxu0 %v122
    %241 = vmatprep.subr.mxu0 %v119
    %242 = vmatpush1.msra.mxu0 %v118
    %243 = vmatprep.subr.mxu0 0.0
    %244 = vmatpush2.msra.mxu0 0.0
    %245 = vmatprep.subr.mxu0 0.0
    %246 = vmatpush2.msra.mxu0 0.0
    %247 = vmatprep.subr.mxu0 0.0
    %248 = vmatpush2.msra.mxu0 0.0
    %249 = vmatprep.subr.mxu0 0.0
    %250 = vmatpush2.msra.mxu0 0.0
    %251 = vmatprep.subr.mxu0 0.0
    %252 = vmatpush2.msra.mxu0 0.0
    %253 = vmatprep.subr.mxu0 0.0
    %254 = vmatpush2.msra.mxu0 0.0
    %255 = vmatprep.subr.mxu0 0.0
    %256 = vmatpush2.msra.mxu0 0.0
    %257 = vmatprep.subr.mxu0 0.0
    %258 = vmatpush2.msra.mxu0 0.0
    %259 = vmatprep.subr.mxu0 0.0
    %260 = vmatpush2.msra.mxu0 0.0
    %261 = vmatprep.subr.mxu0 0.0
    %262 = vmatpush2.msra.mxu0 0.0
    %263 = vmatprep.subr.mxu0 0.0
    %264 = vmatpush2.msra.mxu0 0.0
    %265 = vmatprep.subr.mxu0 0.0
    %266 = vmatpush2.msra.mxu0 0.0
    %267 = vmatprep.subr.mxu0 0.0
    %268 = vmatpush2.msra.mxu0 0.0
    %269 = vmatprep.subr.mxu0 0.0
    %270 = vmatpush2.msra.mxu0 0.0
    %271 = vmatprep.subr.mxu0 0.0
    %272 = vmatpush2.msra.mxu0 0.0
    %273 = vmatprep.subr.mxu0 0.0
    %274 = vmatpush2.msra.mxu0 0.0
    %275 = vmatprep.mubr.f32.mxu0 0.0
    %276 = vmatmul.mubr.f32.gmra.mxu0 %v138
    %v277 = vpop.f32.mrf.mxu0
    %v278 = vadd.f32 1e-08, %v277
    %v279 = vpop.f32.mrf.mxu0
    %v280 = vadd.f32 1e-08, %v279
    %281 = vdwg.mxu0
    %v282 = vrsqrt.pop %v207
    %v283 = vmul.f32 %v207, %v282
    %vm284 = vcmp.eq.f32.partialorder %v207, inf
    %v285 = vsel %vm284, %v207, %v283
    %vm286 = vcmp.eq.f32.partialorder %v207, 0.0
    %v287 = vand.u32 %v207, 2147483648
    %v288 = vsel %vm286, %v287, %v285
    %v289 = vrsqrt.pop %v209
    %v290 = vmul.f32 %v209, %v289
    %vm291 = vcmp.eq.f32.partialorder %v209, inf
    %v292 = vsel %vm291, %v209, %v290
    %vm293 = vcmp.eq.f32.partialorder %v209, 0.0
    %v294 = vand.u32 %v209, 2147483648
    %v295 = vsel %vm293, %v294, %v292
    %v296 = vrsqrt.pop %v278
    %v297 = vmul.f32 %v278, %v296
    %vm298 = vcmp.eq.f32.partialorder %v278, inf
    %v299 = vsel %vm298, %v278, %v297
    %vm300 = vcmp.eq.f32.partialorder %v278, 0.0
    %v301 = vand.u32 %v278, 2147483648
    %v302 = vsel %vm300, %v301, %v299
    %v303 = vrsqrt.pop %v280
    %v304 = vmul.f32 %v280, %v303
    %vm305 = vcmp.eq.f32.partialorder %v280, inf
    %v306 = vsel %vm305, %v280, %v304
    %vm307 = vcmp.eq.f32.partialorder %v280, 0.0
    %v308 = vand.u32 %v280, 2147483648
    %v309 = vsel %vm307, %v308, %v306
    %v310 = vld [vmem:[#allocation8] sm:$0xff]
    %v311 = vld [vmem:[#allocation8 + $0x8] sm:$0xff]
    %v312 = vld [vmem:[#allocation8 + $0x10] sm:$0xff]
    %v313 = vld [vmem:[#allocation8 + $0x18] sm:$0xff]
    %v314 = vmul.f32 %v288, %v310
    %v315 = vmul.f32 %v295, %v311
    %v316 = vmul.f32 %v302, %v312
    %v317 = vmul.f32 %v309, %v313
    %v319 = vsel %vm136, %v115, 0
    %321 = vmatprep.subr.mxu0 0.0
    %322 = vmatpush1.msra.mxu0 0.0
    %323 = vmatprep.subr.mxu0 0.0
    %324 = vmatpush1.msra.mxu0 0.0
    %325 = vmatprep.subr.mxu0 0.0
    %326 = vmatpush1.msra.mxu0 0.0
    %327 = vmatprep.subr.mxu0 0.0
    %328 = vmatpush1.msra.mxu0 0.0
    %329 = vmatprep.subr.mxu0 0.0
    %330 = vmatpush1.msra.mxu0 0.0
    %331 = vmatprep.subr.mxu0 0.0
    %332 = vmatpush1.msra.mxu0 0.0
    %333 = vmatprep.subr.mxu0 0.0
    %334 = vmatpush1.msra.mxu0 0.0
    %335 = vmatprep.subr.mxu0 0.0
    %336 = vmatpush1.msra.mxu0 0.0
    %337 = vmatprep.subr.mxu0 0.0
    %338 = vmatpush1.msra.mxu0 0.0
    %339 = vmatprep.subr.mxu0 0.0
    %340 = vmatpush1.msra.mxu0 0.0
    %341 = vmatprep.subr.mxu0 0.0
    %342 = vmatpush1.msra.mxu0 0.0
    %343 = vmatprep.subr.mxu0 %v107
    %344 = vmatpush1.msra.mxu0 %v106
    %345 = vmatprep.subr.mxu0 %v103
    %346 = vmatpush1.msra.mxu0 %v102
    %347 = vmatprep.subr.mxu0 %v99
    %348 = vmatpush1.msra.mxu0 %v98
    %349 = vmatprep.subr.mxu0 %v95
    %350 = vmatpush1.msra.mxu0 %v94
    %351 = vmatprep.subr.mxu0 %v91
    %352 = vmatpush1.msra.mxu0 %v90
    %353 = vmatprep.subr.mxu0 0.0
    %354 = vmatpush2.msra.mxu0 0.0
    %355 = vmatprep.subr.mxu0 0.0
    %356 = vmatpush2.msra.mxu0 0.0
    %357 = vmatprep.subr.mxu0 0.0
    %358 = vmatpush2.msra.mxu0 0.0
    %359 = vmatprep.subr.mxu0 0.0
    %360 = vmatpush2.msra.mxu0 0.0
    %361 = vmatprep.subr.mxu0 0.0
    %362 = vmatpush2.msra.mxu0 0.0
    %363 = vmatprep.subr.mxu0 0.0
    %364 = vmatpush2.msra.mxu0 0.0
    %365 = vmatprep.subr.mxu0 0.0
    %366 = vmatpush2.msra.mxu0 0.0
    %367 = vmatprep.subr.mxu0 0.0
    %368 = vmatpush2.msra.mxu0 0.0
    %369 = vmatprep.subr.mxu0 0.0
    %370 = vmatpush2.msra.mxu0 0.0
    %371 = vmatprep.subr.mxu0 0.0
    %372 = vmatpush2.msra.mxu0 0.0
    %373 = vmatprep.subr.mxu0 0.0
    %374 = vmatpush2.msra.mxu0 0.0
    %375 = vmatprep.subr.mxu0 0.0
    %376 = vmatpush2.msra.mxu0 0.0
    %377 = vmatprep.subr.mxu0 0.0
    %378 = vmatpush2.msra.mxu0 0.0
    %379 = vmatprep.subr.mxu0 0.0
    %380 = vmatpush2.msra.mxu0 0.0
    %381 = vmatprep.subr.mxu0 0.0
    %382 = vmatpush2.msra.mxu0 0.0
    %383 = vmatprep.subr.mxu0 0.0
    %384 = vmatpush2.msra.mxu0 0.0
    %385 = vmatprep.mubr.f32.mxu0 0.0
    %386 = vmatmul.mubr.f32.gmra.mxu0 %v319
    %v387 = vpop.f32.mrf.mxu0
    %v388 = vadd.f32 %v314, %v387
    %v389 = vpop.f32.mrf.mxu0
    %v390 = vadd.f32 %v315, %v389
    %391 = vdwg.mxu0
    %392 = vmatprep.subr.mxu0 0.0
    %393 = vmatpush1.msra.mxu0 0.0
    %394 = vmatprep.subr.mxu0 0.0
    %395 = vmatpush1.msra.mxu0 0.0
    %396 = vmatprep.subr.mxu0 0.0
    %397 = vmatpush1.msra.mxu0 0.0
    %398 = vmatprep.subr.mxu0 0.0
    %399 = vmatpush1.msra.mxu0 0.0
    %400 = vmatprep.subr.mxu0 0.0
    %401 = vmatpush1.msra.mxu0 0.0
    %402 = vmatprep.subr.mxu0 0.0
    %403 = vmatpush1.msra.mxu0 0.0
    %404 = vmatprep.subr.mxu0 0.0
    %405 = vmatpush1.msra.mxu0 0.0
    %406 = vmatprep.subr.mxu0 0.0
    %407 = vmatpush1.msra.mxu0 0.0
    %408 = vmatprep.subr.mxu0 0.0
    %409 = vmatpush1.msra.mxu0 0.0
    %410 = vmatprep.subr.mxu0 0.0
    %411 = vmatpush1.msra.mxu0 0.0
    %412 = vmatprep.subr.mxu0 0.0
    %413 = vmatpush1.msra.mxu0 0.0
    %414 = vmatprep.subr.mxu0 %v109
    %415 = vmatpush1.msra.mxu0 %v108
    %416 = vmatprep.subr.mxu0 %v105
    %417 = vmatpush1.msra.mxu0 %v104
    %418 = vmatprep.subr.mxu0 %v101
    %419 = vmatpush1.msra.mxu0 %v100
    %420 = vmatprep.subr.mxu0 %v97
    %421 = vmatpush1.msra.mxu0 %v96
    %422 = vmatprep.subr.mxu0 %v93
    %423 = vmatpush1.msra.mxu0 %v92
    %424 = vmatprep.subr.mxu0 0.0
    %425 = vmatpush2.msra.mxu0 0.0
    %426 = vmatprep.subr.mxu0 0.0
    %427 = vmatpush2.msra.mxu0 0.0
    %428 = vmatprep.subr.mxu0 0.0
    %429 = vmatpush2.msra.mxu0 0.0
    %430 = vmatprep.subr.mxu0 0.0
    %431 = vmatpush2.msra.mxu0 0.0
    %432 = vmatprep.subr.mxu0 0.0
    %433 = vmatpush2.msra.mxu0 0.0
    %434 = vmatprep.subr.mxu0 0.0
    %435 = vmatpush2.msra.mxu0 0.0
    %436 = vmatprep.subr.mxu0 0.0
    %437 = vmatpush2.msra.mxu0 0.0
    %438 = vmatprep.subr.mxu0 0.0
    %439 = vmatpush2.msra.mxu0 0.0
    %440 = vmatprep.subr.mxu0 0.0
    %441 = vmatpush2.msra.mxu0 0.0
    %442 = vmatprep.subr.mxu0 0.0
    %443 = vmatpush2.msra.mxu0 0.0
    %444 = vmatprep.subr.mxu0 0.0
    %445 = vmatpush2.msra.mxu0 0.0
    %446 = vmatprep.subr.mxu0 0.0
    %447 = vmatpush2.msra.mxu0 0.0
    %448 = vmatprep.subr.mxu0 0.0
    %449 = vmatpush2.msra.mxu0 0.0
    %450 = vmatprep.subr.mxu0 0.0
    %451 = vmatpush2.msra.mxu0 0.0
    %452 = vmatprep.subr.mxu0 0.0
    %453 = vmatpush2.msra.mxu0 0.0
    %454 = vmatprep.subr.mxu0 0.0
    %455 = vmatpush2.msra.mxu0 0.0
    %456 = vmatprep.mubr.f32.mxu0 0.0
    %457 = vmatmul.mubr.f32.gmra.mxu0 %v319
    %v458 = vpop.f32.mrf.mxu0
    %v459 = vadd.f32 %v316, %v458
    %v460 = vpop.f32.mrf.mxu0
    %v461 = vadd.f32 %v317, %v460
    %462 = vdwg.mxu0
    %463 = vst [vmem:[#allocation10] sm:$0xff] %v388
    %464 = vst [vmem:[#allocation10 + $0x8] sm:$0xff] %v390
    %465 = vst [vmem:[#allocation10 + $0x10] sm:$0xff] %v459
    %466 = vst [vmem:[#allocation10 + $0x18] sm:$0xff] %v461
    %v467 = vadd.f32 %v388, %v390
    %v468 = vadd.f32 %v467, %v459
    %v469 = vadd.f32 %v468, %v461
    %470 = vadd.xlane.f32.xlu0 %v469
    %v471 = vpop.xlane.xlu0 %470
    %vm472 = vcmask 7168
    %473 = vst.msk [vmem:[%s5] sm:$0xff] %vm472, %v471
    %v474 = vmul.f32 %v388, %v388
    %v475 = vmul.f32 %v390, %v390
    %v476 = vmul.f32 %v459, %v459
    %v477 = vmul.f32 %v461, %v461
    %v478 = vadd.f32 %v474, %v475
    %v479 = vadd.f32 %v478, %v476
    %v480 = vadd.f32 %v479, %v477
    %481 = vadd.xlane.f32.xlu0 %v480
    %v482 = vpop.xlane.xlu0 %481
    %483 = vst.msk [vmem:[%s6] sm:$0xff] %vm472, %v482
    // Predicated region
    $region34: #{tpu_custom_call.1} parent=1 // pred_check
      _
    $region35: #{tpu_custom_call.1} parent=1 // pred_check_branch
      %485 = sbr.rel (0) target = $region37
    $region36: #{tpu_custom_call.1} parent=1 // pred_region
      %s487 = ssub.s32 512, 512
      %488 = vsyncadd [#allocation4], %s487
      %s490 = sshll.u32 [#allocation10], 4
      %s491 = int_to_ptr.vmem [resolvable:$true] %s490
      %493 = dma.vmem_to_hbm [thread:$0]  %s491, 512, %s4, [#allocation4]
    $region37: #{tpu_custom_call.1} parent=1 // pred_fallthru
      _
    // Predicated region
    $region38: #{tpu_custom_call.1} parent=1 // pred_check
      _
    $region39: #{tpu_custom_call.1} parent=1 // pred_check_branch
      %495 = sbr.rel (0) target = $region41
    $region40: #{tpu_custom_call.1} parent=1 // pred_region
      _
    $region41: #{tpu_custom_call.1} parent=1 // pred_fallthru
      _
    // Predicated region
    $region42: #{tpu_custom_call.1} parent=1 // pred_check
      _
    $region43: #{tpu_custom_call.1} parent=1 // pred_check_branch
      %497 = sbr.rel (0) target = $region45
    $region44: #{tpu_custom_call.1} parent=1 // pred_region
      _
    $region45: #{tpu_custom_call.1} parent=1 // pred_fallthru
      _
    // Predicated region
    $region46: #{tpu_custom_call.1} parent=1 // pred_check
      _
    $region47: #{tpu_custom_call.1} parent=1 // pred_check_branch
      %499 = sbr.rel (0) target = $region49
    $region48: #{tpu_custom_call.1} parent=1 // pred_region
      %500 = dma.done [#allocation4], 512
    $region49: #{tpu_custom_call.1} parent=1 // pred_fallthru
      _
    // Predicated region
    $region50: #{tpu_custom_call.1} parent=1 // pred_check
      _
    $region51: #{tpu_custom_call.1} parent=1 // pred_check_branch
      %502 = sbr.rel (0) target = $region53
    $region52: #{tpu_custom_call.1} parent=1 // pred_region
      _
    $region53: #{tpu_custom_call.1} parent=1 // pred_fallthru
      _
    // Predicated region
    $region54: #{tpu_custom_call.1} parent=1 // pred_check
      _
    $region55: #{tpu_custom_call.1} parent=1 // pred_check_branch
      %504 = sbr.rel (0) target = $region57
    $region56: #{tpu_custom_call.1} parent=1 // pred_region
      _
    $region57: #{tpu_custom_call.1} parent=1 // pred_fallthru
      _
    %505 = vsyncpa [#allocation3], 1
    %506 = vsyncpa [#allocation6], 1
    %507 = vsyncpa [#allocation9], 1
    %508 = vsyncpa [#allocation4], 1

</llo_original>
